<compile_context>
chip_gen: v7x
topology: tpu7x:2x2x1
jax: 0.10.0
libtpu: 0.0.40
codegen_flags: <defaults>
</compile_context>

<pallas_src>
import jax
import jax.numpy as jnp
from jax.experimental import pallas as pl
from jax.experimental.pallas import tpu as pltpu

# ---- deterministic "fitted model" parameters (synthetic, as in __init__) ----
K_PARAM = 0.75      # base growth rate k
M_PARAM = 0.10      # base offset m
FLOOR = 2.0
START = 0.0
T_SCALE = 10.0
Y_SCALE = 3.5
NUM_CHANGEPOINTS = 8

LANES = 128
MAX_TILE_ROWS = 2048   # (2048, 128) f32 tile = 1 MiB per buffer


def _ceil_div(a, b):
    return -(-a // b)


def _round_up(a, b):
    return _ceil_div(a, b) * b


def prophet_kernel(cp_ref, a_ref, b_ref, coef_ref, flag_ref, x_ref, o_ref):
    """cp_ref:   (S,)   changepoints in raw-x space (SMEM, scalar prefetch).
    a_ref:    (G,)   per-tile slope (base + all changepoints entirely below tile).
    b_ref:    (G,)   per-tile offset (matching offsets).
    coef_ref: (G*S,) per-tile per-changepoint vector coefficient; nonzero only
                      for changepoints that straddle the tile.
    flag_ref: (G,)   int32, 1 iff any changepoint straddles this tile.
    x_ref:    (tile_rows, 128) sorted raw timestamps (VMEM tile).
    o_ref:    (tile_rows, 128) trend output tile."""
    i = pl.program_id(0)
    S = cp_ref.shape[0]          # trip count derived from the array, not hardcoded

    x = x_ref[...]
    # Common path: pure affine (2 VPU ops/element).
    o_ref[...] = a_ref[i] * x + b_ref[i]

    # Rare path: only tiles containing a changepoint boundary (<= S tiles total).
    @pl.when(flag_ref[i] > 0)
    def _():
        acc = o_ref[...]
        base = i * S
        for s in range(S):       # S is small and static -> unrolled
            acc = acc + coef_ref[base + s] * jnp.maximum(x - cp_ref[s], 0.0)
        o_ref[...] = acc


def prophet_forward(x, changepoints_t, deltas):
    """x: [N] float32 raw timestamps. Returns trend [N] float32."""
    assert changepoints_t.shape == deltas.shape, "changepoints/deltas mismatch"
    S = int(changepoints_t.shape[0])

    # Glue: sorting stays outside the kernel (multi-pass HBM op, dominates wall time).
    # TODO(synk): in-kernel sort not implemented; jnp.sort used as preprocessing glue.
    x_sorted = jnp.sort(x.astype(jnp.float32))
    n = int(x_sorted.shape[0])

    # Fold both affines into constants (kernel consumes raw x directly).
    A = K_PARAM * Y_SCALE / T_SCALE
    B = M_PARAM * Y_SCALE + FLOOR - K_PARAM * Y_SCALE * START / T_SCALE
    cp_x = (START + changepoints_t.astype(jnp.float32) * T_SCALE)
    C = (Y_SCALE / T_SCALE) * deltas.astype(jnp.float32)

    # Lane-dense tiling; force >= 2 grid steps for mid-sized inputs (v7x megacore).
    rows = _ceil_div(n, LANES)
    if rows <= 64:
        tile_rows = max(8, _round_up(rows, 8))
    elif rows <= 2 * MAX_TILE_ROWS:
        tile_rows = _round_up(_ceil_div(rows, 2), 8)
    else:
        tile_rows = MAX_TILE_ROWS
    grid_len = _ceil_div(rows, tile_rows)
    rows_padded = grid_len * tile_rows
    n_padded = rows_padded * LANES

    # Edge-pad (replicate the max element) so every tile stays sorted and the
    # per-tile min/max below remain valid; padded outputs are sliced off later.
    x_pad = jnp.pad(x_sorted, (0, n_padded - n), mode="edge")
    x2 = x_pad.reshape(rows_padded, LANES)

    # x is globally sorted -> each tile's min/max are its first/last elements.
    tile_idx = jnp.arange(grid_len)
    elems_per_tile = tile_rows * LANES
    xmin = x_pad[tile_idx * elems_per_tile]
    xmax = x_pad[(tile_idx + 1) * elems_per_tile - 1]

    # Classify every (tile, changepoint) pair.
    full = cp_x[None, :] <= xmin[:, None]                         # affects whole tile
    none = cp_x[None, :] >= xmax[:, None]                         # affects nothing
    straddle = jnp.logical_and(jnp.logical_not(full), jnp.logical_not(none))

    a_t = A + jnp.sum(jnp.where(full, C[None, :], 0.0), axis=1)
    b_t = B + jnp.sum(jnp.where(full, -C[None, :] * cp_x[None, :], 0.0), axis=1)
    coef = jnp.where(straddle, C[None, :], 0.0).reshape(-1)       # (G*S,)
    flag = jnp.any(straddle, axis=1).astype(jnp.int32)            # (G,)

    out = pl.pallas_call(
        prophet_kernel,
        out_shape=jax.ShapeDtypeStruct((rows_padded, LANES), jnp.float32),
        grid_spec=pltpu.PrefetchScalarGridSpec(
            num_scalar_prefetch=5,
            grid=(grid_len,),
            in_specs=[pl.BlockSpec((tile_rows, LANES), lambda i, *_: (i, 0))],
            out_specs=pl.BlockSpec((tile_rows, LANES), lambda i, *_: (i, 0)),
        ),
        compiler_params=pltpu.CompilerParams(
            dimension_semantics=("parallel",)),
    )(cp_x.astype(jnp.float32),
      a_t.astype(jnp.float32),
      b_t.astype(jnp.float32),
      coef.astype(jnp.float32),
      flag,
      x2)

    return out.reshape(n_padded)[:n]


def prophet_reference(x, changepoints_t, deltas):
    """Pure-JAX reference matching the PyTorch loop semantics (f32 VPU math only)."""
    xs = jnp.sort(x.astype(jnp.float32))
    t = (xs - START) / T_SCALE
    gammas = -changepoints_t * deltas
    ind = (t[:, None] >= changepoints_t[None, :]).astype(jnp.float32)
    k_t = K_PARAM + jnp.sum(ind * deltas[None, :], axis=1)
    m_t = M_PARAM + jnp.sum(ind * gammas[None, :], axis=1)
    return (k_t * t + m_t) * Y_SCALE + FLOOR


def _check(x, changepoints_t, deltas, tag):
    trend = jax.block_until_ready(prophet_forward(x, changepoints_t, deltas))
    ref = prophet_reference(x, changepoints_t, deltas)
    if not jnp.allclose(trend, ref, rtol=1e-5, atol=2e-5):
        raise AssertionError(f"Pallas Prophet kernel mismatch ({tag})")


if __name__ == "__main__":
    key = jax.random.PRNGKey(0)
    k_x, k_cp, k_d = jax.random.split(key, 3)

    # Raw timestamps in [0, 10): after scaling, t in [0, 1), same regime Prophet uses.
    # Changepoints in (0, 1) t-space, sorted; deltas are small rate adjustments.
    changepoints_t = jnp.sort(
        jax.random.uniform(k_cp, (NUM_CHANGEPOINTS,), dtype=jnp.float32,
                           minval=0.05, maxval=0.95))
    deltas = 0.2 * jax.random.normal(k_d, (NUM_CHANGEPOINTS,), dtype=jnp.float32)

    # Single-tile path.
    x = jax.random.uniform(k_x, (2048,), dtype=jnp.float32, minval=0.0, maxval=10.0)
    _check(x, changepoints_t, deltas, "N=2048")

    # Non-multiple-of-128 length (padding path).
    x2 = jax.random.uniform(k_x, (777,), dtype=jnp.float32, minval=0.0, maxval=10.0)
    _check(x2, changepoints_t, deltas, "N=777")

    # Multi-tile grid: exercises the per-tile affine fold + straddle paths.
    x3 = jax.random.uniform(k_x, (16500,), dtype=jnp.float32, minval=0.0, maxval=10.0)
    _check(x3, changepoints_t, deltas, "N=16500")

    print("KERNEL_OK")
</pallas_src>

<mosaic_0001>
module attributes {stable_mosaic.version = 11 : i64} {
  func.func @prophet_kernel(%arg0: i32, %arg1: memref<8xf32, #tpu.memory_space<smem>>, %arg2: memref<1xf32, #tpu.memory_space<smem>>, %arg3: memref<1xf32, #tpu.memory_space<smem>>, %arg4: memref<8xf32, #tpu.memory_space<smem>>, %arg5: memref<1xi32, #tpu.memory_space<smem>>, %arg6: memref<16x128xf32, #tpu.memory_space<vmem>>, %arg7: memref<16x128xf32, #tpu.memory_space<vmem>>) attributes {dimension_semantics = [#tpu.dimension_semantics<parallel>], iteration_bounds = array<i64: 1>, scalar_prefetch = 5 : i64, scratch_operands = 0 : i64, tpu.core_type = #tpu.core_type<tc>, window_params = [{transform_indices = @transform_0, window_bounds = array<i64: 16, 128>}, {transform_indices = @transform_1, window_bounds = array<i64: 16, 128>}]} {
    %c0 = arith.constant 0 : index
    %c0_0 = arith.constant 0 : index
    %0 = vector.load %arg6[%c0, %c0_0] : memref<16x128xf32, #tpu.memory_space<vmem>>, vector<16x128xf32>
    %1 = arith.index_cast %arg0 : i32 to index
    %2 = memref.load %arg2[%1] : memref<1xf32, #tpu.memory_space<smem>>
    %3 = vector.broadcast %2 : f32 to vector<16x128xf32>
    %4 = arith.mulf %3, %0 : vector<16x128xf32>
    %5 = arith.index_cast %arg0 : i32 to index
    %6 = memref.load %arg3[%5] : memref<1xf32, #tpu.memory_space<smem>>
    %7 = vector.broadcast %6 : f32 to vector<16x128xf32>
    %8 = arith.addf %4, %7 : vector<16x128xf32>
    %c0_1 = arith.constant 0 : index
    %c0_2 = arith.constant 0 : index
    %9 = vector.load %arg7[%c0_1, %c0_2] : memref<16x128xf32, #tpu.memory_space<vmem>>, vector<16x128xf32>
    tpu.vector_store %arg7[%c0_1, %c0_2], %8 {strides = array<i32>} : memref<16x128xf32, #tpu.memory_space<vmem>>, vector<16x128xf32>,
    %10 = arith.index_cast %arg0 : i32 to index
    %11 = memref.load %arg5[%10] : memref<1xi32, #tpu.memory_space<smem>>
    %c0_i32 = arith.constant 0 : i32
    %12 = arith.cmpi sgt, %11, %c0_i32 : i32
    %13 = arith.extui %12 : i1 to i32
    %c0_i32_3 = arith.constant 0 : i32
    %14 = arith.cmpi ne, %13, %c0_i32_3 : i32
    scf.if %14 {
      %c0_4 = arith.constant 0 : index
      %c0_5 = arith.constant 0 : index
      %15 = vector.load %arg7[%c0_4, %c0_5] : memref<16x128xf32, #tpu.memory_space<vmem>>, vector<16x128xf32>
      %c8_i32 = arith.constant 8 : i32
      %16 = arith.muli %arg0, %c8_i32 : i32
      %c0_i32_6 = arith.constant 0 : i32
      %17 = arith.addi %16, %c0_i32_6 : i32
      %18 = arith.index_cast %17 : i32 to index
      %19 = memref.load %arg4[%18] : memref<8xf32, #tpu.memory_space<smem>>
      %c0_7 = arith.constant 0 : index
      %20 = memref.load %arg1[%c0_7] : memref<8xf32, #tpu.memory_space<smem>>
      %21 = vector.broadcast %20 : f32 to vector<16x128xf32>
      %22 = arith.subf %0, %21 : vector<16x128xf32>
      %cst = arith.constant 0.000000e+00 : f32
      %23 = vector.broadcast %cst : f32 to vector<16x128xf32>
      %24 = arith.maximumf %22, %23 : vector<16x128xf32>
      %25 = vector.broadcast %19 : f32 to vector<16x128xf32>
      %26 = arith.mulf %25, %24 : vector<16x128xf32>
      %27 = arith.addf %15, %26 : vector<16x128xf32>
      %c1_i32 = arith.constant 1 : i32
      %28 = arith.addi %16, %c1_i32 : i32
      %29 = arith.index_cast %28 : i32 to index
      %30 = memref.load %arg4[%29] : memref<8xf32, #tpu.memory_space<smem>>
      %c1 = arith.constant 1 : index
      %31 = memref.load %arg1[%c1] : memref<8xf32, #tpu.memory_space<smem>>
      %32 = vector.broadcast %31 : f32 to vector<16x128xf32>
      %33 = arith.subf %0, %32 : vector<16x128xf32>
      %cst_8 = arith.constant 0.000000e+00 : f32
      %34 = vector.broadcast %cst_8 : f32 to vector<16x128xf32>
      %35 = arith.maximumf %33, %34 : vector<16x128xf32>
      %36 = vector.broadcast %30 : f32 to vector<16x128xf32>
      %37 = arith.mulf %36, %35 : vector<16x128xf32>
      %38 = arith.addf %27, %37 : vector<16x128xf32>
      %c2_i32 = arith.constant 2 : i32
      %39 = arith.addi %16, %c2_i32 : i32
      %40 = arith.index_cast %39 : i32 to index
      %41 = memref.load %arg4[%40] : memref<8xf32, #tpu.memory_space<smem>>
      %c2 = arith.constant 2 : index
      %42 = memref.load %arg1[%c2] : memref<8xf32, #tpu.memory_space<smem>>
      %43 = vector.broadcast %42 : f32 to vector<16x128xf32>
      %44 = arith.subf %0, %43 : vector<16x128xf32>
      %cst_9 = arith.constant 0.000000e+00 : f32
      %45 = vector.broadcast %cst_9 : f32 to vector<16x128xf32>
      %46 = arith.maximumf %44, %45 : vector<16x128xf32>
      %47 = vector.broadcast %41 : f32 to vector<16x128xf32>
      %48 = arith.mulf %47, %46 : vector<16x128xf32>
      %49 = arith.addf %38, %48 : vector<16x128xf32>
      %c3_i32 = arith.constant 3 : i32
      %50 = arith.addi %16, %c3_i32 : i32
      %51 = arith.index_cast %50 : i32 to index
      %52 = memref.load %arg4[%51] : memref<8xf32, #tpu.memory_space<smem>>
      %c3 = arith.constant 3 : index
      %53 = memref.load %arg1[%c3] : memref<8xf32, #tpu.memory_space<smem>>
      %54 = vector.broadcast %53 : f32 to vector<16x128xf32>
      %55 = arith.subf %0, %54 : vector<16x128xf32>
      %cst_10 = arith.constant 0.000000e+00 : f32
      %56 = vector.broadcast %cst_10 : f32 to vector<16x128xf32>
      %57 = arith.maximumf %55, %56 : vector<16x128xf32>
      %58 = vector.broadcast %52 : f32 to vector<16x128xf32>
      %59 = arith.mulf %58, %57 : vector<16x128xf32>
      %60 = arith.addf %49, %59 : vector<16x128xf32>
      %c4_i32 = arith.constant 4 : i32
      %61 = arith.addi %16, %c4_i32 : i32
      %62 = arith.index_cast %61 : i32 to index
      %63 = memref.load %arg4[%62] : memref<8xf32, #tpu.memory_space<smem>>
      %c4 = arith.constant 4 : index
      %64 = memref.load %arg1[%c4] : memref<8xf32, #tpu.memory_space<smem>>
      %65 = vector.broadcast %64 : f32 to vector<16x128xf32>
      %66 = arith.subf %0, %65 : vector<16x128xf32>
      %cst_11 = arith.constant 0.000000e+00 : f32
      %67 = vector.broadcast %cst_11 : f32 to vector<16x128xf32>
      %68 = arith.maximumf %66, %67 : vector<16x128xf32>
      %69 = vector.broadcast %63 : f32 to vector<16x128xf32>
      %70 = arith.mulf %69, %68 : vector<16x128xf32>
      %71 = arith.addf %60, %70 : vector<16x128xf32>
      %c5_i32 = arith.constant 5 : i32
      %72 = arith.addi %16, %c5_i32 : i32
      %73 = arith.index_cast %72 : i32 to index
      %74 = memref.load %arg4[%73] : memref<8xf32, #tpu.memory_space<smem>>
      %c5 = arith.constant 5 : index
      %75 = memref.load %arg1[%c5] : memref<8xf32, #tpu.memory_space<smem>>
      %76 = vector.broadcast %75 : f32 to vector<16x128xf32>
      %77 = arith.subf %0, %76 : vector<16x128xf32>
      %cst_12 = arith.constant 0.000000e+00 : f32
      %78 = vector.broadcast %cst_12 : f32 to vector<16x128xf32>
      %79 = arith.maximumf %77, %78 : vector<16x128xf32>
      %80 = vector.broadcast %74 : f32 to vector<16x128xf32>
      %81 = arith.mulf %80, %79 : vector<16x128xf32>
      %82 = arith.addf %71, %81 : vector<16x128xf32>
      %c6_i32 = arith.constant 6 : i32
      %83 = arith.addi %16, %c6_i32 : i32
      %84 = arith.index_cast %83 : i32 to index
      %85 = memref.load %arg4[%84] : memref<8xf32, #tpu.memory_space<smem>>
      %c6 = arith.constant 6 : index
      %86 = memref.load %arg1[%c6] : memref<8xf32, #tpu.memory_space<smem>>
      %87 = vector.broadcast %86 : f32 to vector<16x128xf32>
      %88 = arith.subf %0, %87 : vector<16x128xf32>
      %cst_13 = arith.constant 0.000000e+00 : f32
      %89 = vector.broadcast %cst_13 : f32 to vector<16x128xf32>
      %90 = arith.maximumf %88, %89 : vector<16x128xf32>
      %91 = vector.broadcast %85 : f32 to vector<16x128xf32>
      %92 = arith.mulf %91, %90 : vector<16x128xf32>
      %93 = arith.addf %82, %92 : vector<16x128xf32>
      %c7_i32 = arith.constant 7 : i32
      %94 = arith.addi %16, %c7_i32 : i32
      %95 = arith.index_cast %94 : i32 to index
      %96 = memref.load %arg4[%95] : memref<8xf32, #tpu.memory_space<smem>>
      %c7 = arith.constant 7 : index
      %97 = memref.load %arg1[%c7] : memref<8xf32, #tpu.memory_space<smem>>
      %98 = vector.broadcast %97 : f32 to vector<16x128xf32>
      %99 = arith.subf %0, %98 : vector<16x128xf32>
      %cst_14 = arith.constant 0.000000e+00 : f32
      %100 = vector.broadcast %cst_14 : f32 to vector<16x128xf32>
      %101 = arith.maximumf %99, %100 : vector<16x128xf32>
      %102 = vector.broadcast %96 : f32 to vector<16x128xf32>
      %103 = arith.mulf %102, %101 : vector<16x128xf32>
      %104 = arith.addf %93, %103 : vector<16x128xf32>
      %c0_15 = arith.constant 0 : index
      %c0_16 = arith.constant 0 : index
      %105 = vector.load %arg7[%c0_15, %c0_16] : memref<16x128xf32, #tpu.memory_space<vmem>>, vector<16x128xf32>
      tpu.vector_store %arg7[%c0_15, %c0_16], %104 {strides = array<i32>} : memref<16x128xf32, #tpu.memory_space<vmem>>, vector<16x128xf32>,
    } else {
    }
    return
  }
  func.func @transform_0(%arg0: i32, %arg1: memref<8xf32, #tpu.memory_space<smem>>, %arg2: memref<1xf32, #tpu.memory_space<smem>>, %arg3: memref<1xf32, #tpu.memory_space<smem>>, %arg4: memref<8xf32, #tpu.memory_space<smem>>, %arg5: memref<1xi32, #tpu.memory_space<smem>>) -> (i32, i32) {
    %c0_i32 = arith.constant 0 : i32
    %c0_i32_0 = arith.constant 0 : i32
    return %arg0, %c0_i32 : i32, i32
  }
  func.func @transform_1(%arg0: i32, %arg1: memref<8xf32, #tpu.memory_space<smem>>, %arg2: memref<1xf32, #tpu.memory_space<smem>>, %arg3: memref<1xf32, #tpu.memory_space<smem>>, %arg4: memref<8xf32, #tpu.memory_space<smem>>, %arg5: memref<1xi32, #tpu.memory_space<smem>>) -> (i32, i32) {
    %c0_i32 = arith.constant 0 : i32
    %c0_i32_0 = arith.constant 0 : i32
    return %arg0, %c0_i32 : i32, i32
  }
}

</mosaic_0001>

<llo_original>
// kernel: tpu_custom_call.1
$region0: #{tpu_custom_call.1}
  #allocation0 [shape = 'u32[]', space=smem, size = 0x4, offset = 0x4, fixed_abs, tag = 'smem constant byte address 0x4 - core index']
  #allocation1 [shape = 'u32[144,128]{1,0:T(1,128)}', space=vmem, size = 0x12000, scoped, tag = 'internal scratch']
  #allocation2 [shape = 's32[1]{0}', space=sflag, size = 0x4, scoped, tag = 'scoped memory for tpu_custom_call.1']
  #allocation3 [shape = 'u8[512]{0}', space=smem, size = 0x200, scoped, tag = 'prefetched SMEM operand 0']
  #allocation4 [shape = 'f32[1]{0:T(128)S(6)}', space=smem, size = 0x200, scoped, tag = 'prefetched SMEM operand 1']
  #allocation5 [shape = 'f32[1]{0:T(128)S(6)}', space=smem, size = 0x200, scoped, tag = 'prefetched SMEM operand 2']
  #allocation6 [shape = 'u8[512]{0}', space=smem, size = 0x200, scoped, tag = 'prefetched SMEM operand 3']
  #allocation7 [shape = 's32[1]{0:T(128)S(6)}', space=smem, size = 0x200, scoped, tag = 'prefetched SMEM operand 4']
  %s0 = inlined_call_operand.vmem [shape: f32[8], index: 0, kind: input, shape index: {}]
  %s1 = inlined_call_operand.<no memory space> [shape: f32[1], index: 1, kind: input, shape index: {}]
  %s2 = inlined_call_operand.<no memory space> [shape: f32[1], index: 2, kind: input, shape index: {}]
  %s3 = inlined_call_operand.vmem [shape: f32[8], index: 3, kind: input, shape index: {}]
  %s4 = inlined_call_operand.<no memory space> [shape: s32[1], index: 4, kind: input, shape index: {}]
  %s5 = inlined_call_operand.vmem [shape: f32[16,128], index: 5, kind: input, shape index: {}]
  %s6 = inlined_call_operand.hbm [shape: f32[16,128], index: 6, kind: output, shape index: {}]
  %s7 = sld [smem:[#allocation0]]
  $region18: #{tpu_custom_call.1} parent=0
    _
  %s9 = ssub.s32 1, %s7
  %s10 = scalar_select 0, %s9, %s7
  %s11 = sshll.u32 %s0, 4
  %s12 = int_to_ptr.vmem [resolvable:$true] %s11
  %14 = dma.vmem_to_smem %s12, 16, [#allocation3], [#allocation2]
  %15 = sst [smem:[#allocation4]] %s1
  %16 = sst [smem:[#allocation5]] %s2
  %s17 = sshll.u32 %s3, 4
  %s18 = int_to_ptr.vmem [resolvable:$true] %s17
  %20 = dma.vmem_to_smem %s18, 16, [#allocation6], [#allocation2]
  %21 = sst [smem:[#allocation7]] %s4
  %22 = dma.done [#allocation2], 32
  %23 = sfence
  $region1: #{tpu_custom_call.1} parent=0
    #allocation8 [shape = 'u8[8192]{0}', space=vmem, size = 0x2000, scoped, tag = 'output window, operand 0, single buffered']
    #allocation9 [shape = 's32[1]{0}', space=sflag, size = 0x4, scoped, tag = 'scoped memory for tpu_custom_call.1']
    %24 = vsyncpa [#allocation9], 0
    // Predicated region
    $region2: #{tpu_custom_call.1} parent=1 // pred_check
      _
    $region3: #{tpu_custom_call.1} parent=1 // pred_check_branch
      %26 = sbr.rel (0) target = $region5
    $region4: #{tpu_custom_call.1} parent=1 // pred_region
      _
    $region5: #{tpu_custom_call.1} parent=1 // pred_fallthru
      _
    %v27 = vld [vmem:[%s5] sm:$0xff]
    %v28 = vld [vmem:[%s5 + $0x8] sm:$0xff]
    %s29 = sld [smem:[#allocation4]]
    %v30 = vstv %s29
    %v31 = vmul.f32 %v30, %v27
    %v32 = vmul.f32 %v30, %v28
    %s33 = sld [smem:[#allocation5]]
    %v34 = vstv %s33
    %v35 = vadd.f32 %v31, %v34
    %v36 = vadd.f32 %v32, %v34
    %37 = vst [vmem:[#allocation8] sm:$0xff] %v35
    %38 = vst [vmem:[#allocation8 + $0x8] sm:$0xff] %v36
    %s39 = sld [smem:[#allocation7]]
    %p40 = scmp.gt.s32.totalorder %s39, 0
    // Predicated region
    $region6: #{tpu_custom_call.1} parent=1 // pred_check
      %p41 = pneg %p40
    $region7: #{tpu_custom_call.1} parent=1 // pred_check_branch
      %43 = sbr.rel (%p41) target = $region9
    $region8: #{tpu_custom_call.1} parent=1 // pred_region
      %v44 = vld [vmem:[#allocation8] sm:$0xff]
      %v45 = vld [vmem:[#allocation8 + $0x8] sm:$0xff]
      %s46 = smul.u32 0, 8
      %s47 = sld [smem:[#allocation6 + %s46]]
      %s48 = sld [smem:[#allocation3]]
      %v49 = vstv %s48
      %v50 = vsub.f32 %v27, %v49
      %v51 = vsub.f32 %v28, %v49
      %v52 = vmax.f32 %v50, 0.0
      %v53 = vmax.f32 %v51, 0.0
      %v54 = vstv %s47
      %v55 = vmul.f32 %v54, %v52
      %v56 = vmul.f32 %v54, %v53
      %v57 = vadd.f32 %v44, %v55
      %v58 = vadd.f32 %v45, %v56
      %s59 = sadd.s32 %s46, 1
      %s60 = sld [smem:[#allocation6 + %s59]]
      %s61 = sld [smem:[#allocation3 + $0x1]]
      %v62 = vstv %s61
      %v63 = vsub.f32 %v27, %v62
      %v64 = vsub.f32 %v28, %v62
      %v65 = vmax.f32 %v63, 0.0
      %v66 = vmax.f32 %v64, 0.0
      %v67 = vstv %s60
      %v68 = vmul.f32 %v67, %v65
      %v69 = vmul.f32 %v67, %v66
      %v70 = vadd.f32 %v57, %v68
      %v71 = vadd.f32 %v58, %v69
      %s72 = sadd.s32 %s46, 2
      %s73 = sld [smem:[#allocation6 + %s72]]
      %s74 = sld [smem:[#allocation3 + $0x2]]
      %v75 = vstv %s74
      %v76 = vsub.f32 %v27, %v75
      %v77 = vsub.f32 %v28, %v75
      %v78 = vmax.f32 %v76, 0.0
      %v79 = vmax.f32 %v77, 0.0
      %v80 = vstv %s73
      %v81 = vmul.f32 %v80, %v78
      %v82 = vmul.f32 %v80, %v79
      %v83 = vadd.f32 %v70, %v81
      %v84 = vadd.f32 %v71, %v82
      %s85 = sadd.s32 %s46, 3
      %s86 = sld [smem:[#allocation6 + %s85]]
      %s87 = sld [smem:[#allocation3 + $0x3]]
      %v88 = vstv %s87
      %v89 = vsub.f32 %v27, %v88
      %v90 = vsub.f32 %v28, %v88
      %v91 = vmax.f32 %v89, 0.0
      %v92 = vmax.f32 %v90, 0.0
      %v93 = vstv %s86
      %v94 = vmul.f32 %v93, %v91
      %v95 = vmul.f32 %v93, %v92
      %v96 = vadd.f32 %v83, %v94
      %v97 = vadd.f32 %v84, %v95
      %s98 = sadd.s32 %s46, 4
      %s99 = sld [smem:[#allocation6 + %s98]]
      %s100 = sld [smem:[#allocation3 + $0x4]]
      %v101 = vstv %s100
      %v102 = vsub.f32 %v27, %v101
      %v103 = vsub.f32 %v28, %v101
      %v104 = vmax.f32 %v102, 0.0
      %v105 = vmax.f32 %v103, 0.0
      %v106 = vstv %s99
      %v107 = vmul.f32 %v106, %v104
      %v108 = vmul.f32 %v106, %v105
      %v109 = vadd.f32 %v96, %v107
      %v110 = vadd.f32 %v97, %v108
      %s111 = sadd.s32 %s46, 5
      %s112 = sld [smem:[#allocation6 + %s111]]
      %s113 = sld [smem:[#allocation3 + $0x5]]
      %v114 = vstv %s113
      %v115 = vsub.f32 %v27, %v114
      %v116 = vsub.f32 %v28, %v114
      %v117 = vmax.f32 %v115, 0.0
      %v118 = vmax.f32 %v116, 0.0
      %v119 = vstv %s112
      %v120 = vmul.f32 %v119, %v117
      %v121 = vmul.f32 %v119, %v118
      %v122 = vadd.f32 %v109, %v120
      %v123 = vadd.f32 %v110, %v121
      %s124 = sadd.s32 %s46, 6
      %s125 = sld [smem:[#allocation6 + %s124]]
      %s126 = sld [smem:[#allocation3 + $0x6]]
      %v127 = vstv %s126
      %v128 = vsub.f32 %v27, %v127
      %v129 = vsub.f32 %v28, %v127
      %v130 = vmax.f32 %v128, 0.0
      %v131 = vmax.f32 %v129, 0.0
      %v132 = vstv %s125
      %v133 = vmul.f32 %v132, %v130
      %v134 = vmul.f32 %v132, %v131
      %v135 = vadd.f32 %v122, %v133
      %v136 = vadd.f32 %v123, %v134
      %s137 = sadd.s32 %s46, 7
      %s138 = sld [smem:[#allocation6 + %s137]]
      %s139 = sld [smem:[#allocation3 + $0x7]]
      %v140 = vstv %s139
      %v141 = vsub.f32 %v27, %v140
      %v142 = vsub.f32 %v28, %v140
      %v143 = vmax.f32 %v141, 0.0
      %v144 = vmax.f32 %v142, 0.0
      %v145 = vstv %s138
      %v146 = vmul.f32 %v145, %v143
      %v147 = vmul.f32 %v145, %v144
      %v148 = vadd.f32 %v135, %v146
      %v149 = vadd.f32 %v136, %v147
      %150 = vst [vmem:[#allocation8] sm:$0xff] %v148
      %151 = vst [vmem:[#allocation8 + $0x8] sm:$0xff] %v149
    $region9: #{tpu_custom_call.1} parent=1 // pred_fallthru
      _
    // Predicated region
    $region10: #{tpu_custom_call.1} parent=1 // pred_check
      _
    $region11: #{tpu_custom_call.1} parent=1 // pred_check_branch
      %153 = sbr.rel (0) target = $region13
    $region12: #{tpu_custom_call.1} parent=1 // pred_region
      %s155 = ssub.s32 256, 256
      %156 = vsyncadd [#allocation9], %s155
      %s157 = sshll.u32 [#allocation8], 4
      %s158 = int_to_ptr.vmem [resolvable:$true] %s157
      %163 = dma.vmem_to_hbm [thread:$0]  %s158, 256, %s6, [#allocation9], 128, 128, 8
    $region13: #{tpu_custom_call.1} parent=1 // pred_fallthru
      _
    // Predicated region
    $region14: #{tpu_custom_call.1} parent=1 // pred_check
      _
    $region15: #{tpu_custom_call.1} parent=1 // pred_check_branch
      %165 = sbr.rel (0) target = $region17
    $region16: #{tpu_custom_call.1} parent=1 // pred_region
      %166 = dma.done [#allocation9], 256
    $region17: #{tpu_custom_call.1} parent=1 // pred_fallthru
      _
    %167 = vsyncpa [#allocation9], 1

</llo_original>
